<compile_context>
chip_gen: v5e
topology: v5e:2x2
jax: 0.10.0
libtpu: 0.0.40
codegen_flags: <defaults>
</compile_context>

<pallas_src>
import math

import jax
import jax.numpy as jnp
from jax.experimental import pallas as pl
from jax.experimental.pallas import tpu as pltpu

LANE = 128      # vreg lane width  -> feature dims padded to multiples of this
SUBLANE = 8     # f32 sublane tile -> batch padded to multiples of this


def _round_up(x, m):
    return (x + m - 1) // m * m


def _make_fused_kernel(n_base, n_tasks, compute_dtype):
    """Build a kernel body for n_base base layers and n_tasks heads (static)."""

    def kernel(*refs):
        x_ref = refs[0]
        base_refs = refs[1:1 + 2 * n_base]
        head_refs = refs[1 + 2 * n_base:1 + 2 * n_base + 4 * n_tasks]
        out_refs = refs[1 + 2 * n_base + 4 * n_tasks:]

        h = x_ref[...]                                      # f32 activations
        # ---- BaseNetwork: Linear + ReLU chain ----
        for l in range(n_base):
            w = base_refs[2 * l][...]                       # (K_p, N_p) compute_dtype
            b = base_refs[2 * l + 1][...]                   # (1, N_p)   f32
            acc = jnp.dot(h.astype(compute_dtype), w,
                          preferred_element_type=jnp.float32)
            h = jnp.maximum(acc + b, 0.0)                   # f32 epilogue (v5e-safe)

        # TODO(synk): BaseMLP.aggregate() is abstract in the reference module;
        # identity aggregation is used here.
        agg = h

        # ---- Task heads: Linear -> ReLU -> Dropout(eval=id) -> Linear ----
        for t in range(n_tasks):
            w1 = head_refs[4 * t][...]
            b1 = head_refs[4 * t + 1][...]
            w2 = head_refs[4 * t + 2][...]
            b2 = head_refs[4 * t + 3][...]
            hh = jnp.dot(agg.astype(compute_dtype), w1,
                         preferred_element_type=jnp.float32)
            hh = jnp.maximum(hh + b1, 0.0)
            # TODO(synk): nn.Dropout is identity in eval mode; training-mode
            # dropout (pltpu PRNG masking) is not implemented.
            o = jnp.dot(hh.astype(compute_dtype), w2,
                        preferred_element_type=jnp.float32) + b2
            out_refs[t][...] = o.astype(out_refs[t].dtype)

    return kernel


def base_mlp_forward(x, base_params, head_params, *,
                     compute_dtype=jnp.float32, block_b=128):
    """Fused BaseMLP forward.

    x           : (B, D_in) f32
    base_params : list of (w (in,out) f32, b (out,) f32)          -- BaseNetwork
    head_params : dict task -> ((w1, b1), (w2, b2))               -- task heads
    returns     : dict task -> (B, num_classes) f32
    """
    B, D_in = x.shape
    task_names = list(head_params.keys())
    n_base = len(base_params)
    n_tasks = len(task_names)

    # Feature-dim chain through the base network, padded to 128 lanes.
    dims = [D_in] + [w.shape[1] for w, _ in base_params]
    dims_p = [_round_up(d, LANE) for d in dims]
    d_agg_p = dims_p[-1]

    # Batch padding + 1-D grid over batch tiles.
    B_p = _round_up(B, SUBLANE)
    tb = B_p if B_p <= block_b else block_b
    B_p = _round_up(B_p, tb)
    grid = (B_p // tb,)

    x_p = jnp.pad(x.astype(jnp.float32),
                  ((0, B_p - B), (0, dims_p[0] - D_in)))

    inputs = [x_p]
    in_specs = [pl.BlockSpec((tb, dims_p[0]), lambda i: (i, 0))]

    def add_linear(w, b, kp, npad):
        # Zero-pad so padded rows/cols contribute exactly 0 -> results unchanged.
        w_p = jnp.pad(w, ((0, kp - w.shape[0]),
                          (0, npad - w.shape[1]))).astype(compute_dtype)
        b_p = jnp.pad(b, (0, npad - b.shape[0])).reshape(1, npad).astype(jnp.float32)
        inputs.extend([w_p, b_p])
        in_specs.extend([pl.BlockSpec((kp, npad), lambda i: (0, 0)),
                         pl.BlockSpec((1, npad), lambda i: (0, 0))])

    for l, (w, b) in enumerate(base_params):
        add_linear(w, b, dims_p[l], dims_p[l + 1])

    out_p_dims = []
    matmul_dims = list(zip(dims_p[:-1], dims_p[1:]))
    for name in task_names:
        (w1, b1), (w2, b2) = head_params[name]
        hid_p = _round_up(w1.shape[1], LANE)
        n_cls_p = _round_up(w2.shape[1], LANE)
        out_p_dims.append(n_cls_p)
        matmul_dims.append((d_agg_p, hid_p))
        matmul_dims.append((hid_p, n_cls_p))
        add_linear(w1, b1, d_agg_p, hid_p)
        add_linear(w2, b2, hid_p, n_cls_p)

    out_shape = tuple(jax.ShapeDtypeStruct((B_p, npd), jnp.float32)
                      for npd in out_p_dims)
    out_specs = tuple(pl.BlockSpec((tb, npd), lambda i: (i, 0))
                      for npd in out_p_dims)

    # Advisory cost estimate for XLA's scheduler.
    flops = sum(2 * B_p * k * n for k, n in matmul_dims)
    bytes_accessed = (sum(int(a.size) * a.dtype.itemsize for a in inputs)
                      + sum(B_p * npd * 4 for npd in out_p_dims))

    # Explicit VMEM budget: double-buffered tiles + resident weights, with
    # margin, capped at 48 MiB (safe under v7x's 64 MiB physical VMEM).
    x_block_bytes = tb * dims_p[0] * 4
    weight_bytes = sum(int(a.size) * a.dtype.itemsize for a in inputs[1:])
    out_block_bytes = sum(tb * npd * 4 for npd in out_p_dims)
    vmem_needed = 2 * (x_block_bytes + weight_bytes + out_block_bytes)
    vmem_limit = int(min(max(4 * vmem_needed, 8 * 1024 * 1024),
                         48 * 1024 * 1024))

    kernel = _make_fused_kernel(n_base, n_tasks, compute_dtype)

    outs = pl.pallas_call(
        kernel,
        out_shape=out_shape,
        grid=grid,
        in_specs=in_specs,
        out_specs=out_specs,
        compiler_params=pltpu.CompilerParams(
            dimension_semantics=("parallel",),   # batch tiles split across TCs (v7x)
            vmem_limit_bytes=vmem_limit),
        cost_estimate=pl.CostEstimate(flops=flops, transcendentals=0,
                                      bytes_accessed=bytes_accessed),
    )(*inputs)

    return {name: outs[i][:B, :head_params[name][1][0].shape[1]]
            for i, name in enumerate(task_names)}


def init_params(input_dim, hidden_dim, output_dims_dict, key,
                autoencoder_layer_sizes=None):
    """Xavier-uniform weights (stored (in,out) == torch weight.T), zero biases."""

    def xavier(k, fan_in, fan_out):
        bound = math.sqrt(6.0 / (fan_in + fan_out))
        return jax.random.uniform(k, (fan_in, fan_out), jnp.float32,
                                  minval=-bound, maxval=bound)

    sizes = autoencoder_layer_sizes or []
    base_params = []
    for din, dout in zip(sizes[:-1], sizes[1:]):
        key, k1 = jax.random.split(key)
        base_params.append((xavier(k1, din, dout), jnp.zeros((dout,), jnp.float32)))

    d_agg = sizes[-1] if sizes else input_dim
    head_params = {}
    for name, n_cls in output_dims_dict.items():
        key, k1, k2 = jax.random.split(key, 3)
        head_params[name] = (
            (xavier(k1, d_agg, hidden_dim), jnp.zeros((hidden_dim,), jnp.float32)),
            (xavier(k2, hidden_dim, n_cls), jnp.zeros((n_cls,), jnp.float32)),
        )
    return base_params, head_params


def reference_forward(x, base_params, head_params, compute_dtype=jnp.float32):
    """Pure-JAX reference with the same casting points as the kernel."""

    def linear(h, w, b):
        acc = jnp.dot(h.astype(compute_dtype), w.astype(compute_dtype),
                      preferred_element_type=jnp.float32)
        return acc + b

    h = x
    for w, b in base_params:
        h = jnp.maximum(linear(h, w, b), 0.0)
    outs = {}
    for name, ((w1, b1), (w2, b2)) in head_params.items():
        hh = jnp.maximum(linear(h, w1, b1), 0.0)
        outs[name] = linear(hh, w2, b2)
    return outs


if __name__ == "__main__":
    key = jax.random.PRNGKey(0)

    input_dim, hidden_dim = 32, 64
    output_dims_dict = {"task_a": 10, "task_b": 3}
    autoencoder_layer_sizes = [32, 64, 16]

    key, pkey = jax.random.split(key)
    base_params, head_params = init_params(
        input_dim, hidden_dim, output_dims_dict, pkey, autoencoder_layer_sizes)

    # --- small-batch f32 check (single grid step, whole MLP in one kernel) ---
    key, xkey = jax.random.split(key)
    x = jax.random.normal(xkey, (8, input_dim), jnp.float32)
    out = base_mlp_forward(x, base_params, head_params)
    out = jax.block_until_ready(out)
    ref = reference_forward(x, base_params, head_params)
    for name, n_cls in output_dims_dict.items():
        assert out[name].shape == (8, n_cls)
        assert jnp.allclose(out[name], ref[name], atol=1e-4, rtol=1e-4), name

    # --- larger-batch bf16-MXU check (multi-step grid, parallel over batch) ---
    key, xkey = jax.random.split(key)
    xb = jax.random.normal(xkey, (256, input_dim), jnp.float32)
    outb = base_mlp_forward(xb, base_params, head_params,
                            compute_dtype=jnp.bfloat16)
    outb = jax.block_until_ready(outb)
    refb = reference_forward(xb, base_params, head_params,
                             compute_dtype=jnp.bfloat16)
    for name, n_cls in output_dims_dict.items():
        assert outb[name].shape == (256, n_cls)
        assert jnp.allclose(outb[name], refb[name], atol=5e-3, rtol=5e-3), name

    print("KERNEL_OK")
</pallas_src>

<mosaic_0001>
module attributes {stable_mosaic.version = 11 : i64} {
  func.func @kernel(%arg0: i32, %arg1: memref<8x128xf32, #tpu.memory_space<vmem>>, %arg2: memref<128x128xf32, #tpu.memory_space<vmem>>, %arg3: memref<1x128xf32, #tpu.memory_space<vmem>>, %arg4: memref<128x128xf32, #tpu.memory_space<vmem>>, %arg5: memref<1x128xf32, #tpu.memory_space<vmem>>, %arg6: memref<128x128xf32, #tpu.memory_space<vmem>>, %arg7: memref<1x128xf32, #tpu.memory_space<vmem>>, %arg8: memref<128x128xf32, #tpu.memory_space<vmem>>, %arg9: memref<1x128xf32, #tpu.memory_space<vmem>>, %arg10: memref<128x128xf32, #tpu.memory_space<vmem>>, %arg11: memref<1x128xf32, #tpu.memory_space<vmem>>, %arg12: memref<128x128xf32, #tpu.memory_space<vmem>>, %arg13: memref<1x128xf32, #tpu.memory_space<vmem>>, %arg14: memref<8x128xf32, #tpu.memory_space<vmem>>, %arg15: memref<8x128xf32, #tpu.memory_space<vmem>>) attributes {dimension_semantics = [#tpu.dimension_semantics<parallel>], iteration_bounds = array<i64: 1>, scalar_prefetch = 0 : i64, scratch_operands = 0 : i64, tpu.core_type = #tpu.core_type<tc>, window_params = [{transform_indices = @transform_0, window_bounds = array<i64: 8, 128>}, {pipeline_mode = #tpu.pipeline_mode<synchronous>, transform_indices = @transform_1, window_bounds = array<i64: 128, 128>}, {pipeline_mode = #tpu.pipeline_mode<synchronous>, transform_indices = @transform_2, window_bounds = array<i64: 1, 128>}, {pipeline_mode = #tpu.pipeline_mode<synchronous>, transform_indices = @transform_3, window_bounds = array<i64: 128, 128>}, {pipeline_mode = #tpu.pipeline_mode<synchronous>, transform_indices = @transform_4, window_bounds = array<i64: 1, 128>}, {pipeline_mode = #tpu.pipeline_mode<synchronous>, transform_indices = @transform_5, window_bounds = array<i64: 128, 128>}, {pipeline_mode = #tpu.pipeline_mode<synchronous>, transform_indices = @transform_6, window_bounds = array<i64: 1, 128>}, {pipeline_mode = #tpu.pipeline_mode<synchronous>, transform_indices = @transform_7, window_bounds = array<i64: 128, 128>}, {pipeline_mode = #tpu.pipeline_mode<synchronous>, transform_indices = @transform_8, window_bounds = array<i64: 1, 128>}, {pipeline_mode = #tpu.pipeline_mode<synchronous>, transform_indices = @transform_9, window_bounds = array<i64: 128, 128>}, {pipeline_mode = #tpu.pipeline_mode<synchronous>, transform_indices = @transform_10, window_bounds = array<i64: 1, 128>}, {pipeline_mode = #tpu.pipeline_mode<synchronous>, transform_indices = @transform_11, window_bounds = array<i64: 128, 128>}, {pipeline_mode = #tpu.pipeline_mode<synchronous>, transform_indices = @transform_12, window_bounds = array<i64: 1, 128>}, {transform_indices = @transform_13, window_bounds = array<i64: 8, 128>}, {transform_indices = @transform_14, window_bounds = array<i64: 8, 128>}]} {
    %c0 = arith.constant 0 : index
    %c0_0 = arith.constant 0 : index
    %0 = vector.load %arg1[%c0, %c0_0] : memref<8x128xf32, #tpu.memory_space<vmem>>, vector<8x128xf32>
    %c0_1 = arith.constant 0 : index
    %c0_2 = arith.constant 0 : index
    %1 = vector.load %arg2[%c0_1, %c0_2] : memref<128x128xf32, #tpu.memory_space<vmem>>, vector<128x128xf32>
    %c0_3 = arith.constant 0 : index
    %c0_4 = arith.constant 0 : index
    %2 = vector.load %arg3[%c0_3, %c0_4] : memref<1x128xf32, #tpu.memory_space<vmem>>, vector<1x128xf32>
    %cst = arith.constant dense<0.000000e+00> : vector<8x128xf32>
    %3 = tpu.matmul %0, %1, %cst {dimension_numbers = #tpu.dot_dimension_numbers<[1], [0], [0], [1], [0, 0, 1, 1], [], []>} : vector<8x128xf32>, vector<128x128xf32>, vector<8x128xf32> -> vector<8x128xf32>
    %4 = vector.broadcast %2 : vector<1x128xf32> to vector<8x128xf32>
    %5 = arith.addf %3, %4 : vector<8x128xf32>
    %cst_5 = arith.constant 0.000000e+00 : f32
    %6 = vector.broadcast %cst_5 : f32 to vector<8x128xf32>
    %7 = arith.maximumf %5, %6 : vector<8x128xf32>
    %c0_6 = arith.constant 0 : index
    %c0_7 = arith.constant 0 : index
    %8 = vector.load %arg4[%c0_6, %c0_7] : memref<128x128xf32, #tpu.memory_space<vmem>>, vector<128x128xf32>
    %c0_8 = arith.constant 0 : index
    %c0_9 = arith.constant 0 : index
    %9 = vector.load %arg5[%c0_8, %c0_9] : memref<1x128xf32, #tpu.memory_space<vmem>>, vector<1x128xf32>
    %cst_10 = arith.constant dense<0.000000e+00> : vector<8x128xf32>
    %10 = tpu.matmul %7, %8, %cst_10 {dimension_numbers = #tpu.dot_dimension_numbers<[1], [0], [0], [1], [0, 0, 1, 1], [], []>} : vector<8x128xf32>, vector<128x128xf32>, vector<8x128xf32> -> vector<8x128xf32>
    %11 = vector.broadcast %9 : vector<1x128xf32> to vector<8x128xf32>
    %12 = arith.addf %10, %11 : vector<8x128xf32>
    %cst_11 = arith.constant 0.000000e+00 : f32
    %13 = vector.broadcast %cst_11 : f32 to vector<8x128xf32>
    %14 = arith.maximumf %12, %13 : vector<8x128xf32>
    %c0_12 = arith.constant 0 : index
    %c0_13 = arith.constant 0 : index
    %15 = vector.load %arg6[%c0_12, %c0_13] : memref<128x128xf32, #tpu.memory_space<vmem>>, vector<128x128xf32>
    %c0_14 = arith.constant 0 : index
    %c0_15 = arith.constant 0 : index
    %16 = vector.load %arg7[%c0_14, %c0_15] : memref<1x128xf32, #tpu.memory_space<vmem>>, vector<1x128xf32>
    %c0_16 = arith.constant 0 : index
    %c0_17 = arith.constant 0 : index
    %17 = vector.load %arg8[%c0_16, %c0_17] : memref<128x128xf32, #tpu.memory_space<vmem>>, vector<128x128xf32>
    %c0_18 = arith.constant 0 : index
    %c0_19 = arith.constant 0 : index
    %18 = vector.load %arg9[%c0_18, %c0_19] : memref<1x128xf32, #tpu.memory_space<vmem>>, vector<1x128xf32>
    %cst_20 = arith.constant dense<0.000000e+00> : vector<8x128xf32>
    %19 = tpu.matmul %14, %15, %cst_20 {dimension_numbers = #tpu.dot_dimension_numbers<[1], [0], [0], [1], [0, 0, 1, 1], [], []>} : vector<8x128xf32>, vector<128x128xf32>, vector<8x128xf32> -> vector<8x128xf32>
    %20 = vector.broadcast %16 : vector<1x128xf32> to vector<8x128xf32>
    %21 = arith.addf %19, %20 : vector<8x128xf32>
    %cst_21 = arith.constant 0.000000e+00 : f32
    %22 = vector.broadcast %cst_21 : f32 to vector<8x128xf32>
    %23 = arith.maximumf %21, %22 : vector<8x128xf32>
    %cst_22 = arith.constant dense<0.000000e+00> : vector<8x128xf32>
    %24 = tpu.matmul %23, %17, %cst_22 {dimension_numbers = #tpu.dot_dimension_numbers<[1], [0], [0], [1], [0, 0, 1, 1], [], []>} : vector<8x128xf32>, vector<128x128xf32>, vector<8x128xf32> -> vector<8x128xf32>
    %25 = vector.broadcast %18 : vector<1x128xf32> to vector<8x128xf32>
    %26 = arith.addf %24, %25 : vector<8x128xf32>
    %c0_23 = arith.constant 0 : index
    %c0_24 = arith.constant 0 : index
    %27 = vector.load %arg14[%c0_23, %c0_24] : memref<8x128xf32, #tpu.memory_space<vmem>>, vector<8x128xf32>
    tpu.vector_store %arg14[%c0_23, %c0_24], %26 {strides = array<i32>} : memref<8x128xf32, #tpu.memory_space<vmem>>, vector<8x128xf32>,
    %c0_25 = arith.constant 0 : index
    %c0_26 = arith.constant 0 : index
    %28 = vector.load %arg10[%c0_25, %c0_26] : memref<128x128xf32, #tpu.memory_space<vmem>>, vector<128x128xf32>
    %c0_27 = arith.constant 0 : index
    %c0_28 = arith.constant 0 : index
    %29 = vector.load %arg11[%c0_27, %c0_28] : memref<1x128xf32, #tpu.memory_space<vmem>>, vector<1x128xf32>
    %c0_29 = arith.constant 0 : index
    %c0_30 = arith.constant 0 : index
    %30 = vector.load %arg12[%c0_29, %c0_30] : memref<128x128xf32, #tpu.memory_space<vmem>>, vector<128x128xf32>
    %c0_31 = arith.constant 0 : index
    %c0_32 = arith.constant 0 : index
    %31 = vector.load %arg13[%c0_31, %c0_32] : memref<1x128xf32, #tpu.memory_space<vmem>>, vector<1x128xf32>
    %cst_33 = arith.constant dense<0.000000e+00> : vector<8x128xf32>
    %32 = tpu.matmul %14, %28, %cst_33 {dimension_numbers = #tpu.dot_dimension_numbers<[1], [0], [0], [1], [0, 0, 1, 1], [], []>} : vector<8x128xf32>, vector<128x128xf32>, vector<8x128xf32> -> vector<8x128xf32>
    %33 = vector.broadcast %29 : vector<1x128xf32> to vector<8x128xf32>
    %34 = arith.addf %32, %33 : vector<8x128xf32>
    %cst_34 = arith.constant 0.000000e+00 : f32
    %35 = vector.broadcast %cst_34 : f32 to vector<8x128xf32>
    %36 = arith.maximumf %34, %35 : vector<8x128xf32>
    %cst_35 = arith.constant dense<0.000000e+00> : vector<8x128xf32>
    %37 = tpu.matmul %36, %30, %cst_35 {dimension_numbers = #tpu.dot_dimension_numbers<[1], [0], [0], [1], [0, 0, 1, 1], [], []>} : vector<8x128xf32>, vector<128x128xf32>, vector<8x128xf32> -> vector<8x128xf32>
    %38 = vector.broadcast %31 : vector<1x128xf32> to vector<8x128xf32>
    %39 = arith.addf %37, %38 : vector<8x128xf32>
    %c0_36 = arith.constant 0 : index
    %c0_37 = arith.constant 0 : index
    %40 = vector.load %arg15[%c0_36, %c0_37] : memref<8x128xf32, #tpu.memory_space<vmem>>, vector<8x128xf32>
    tpu.vector_store %arg15[%c0_36, %c0_37], %39 {strides = array<i32>} : memref<8x128xf32, #tpu.memory_space<vmem>>, vector<8x128xf32>,
    return
  }
  func.func @transform_0(%arg0: i32) -> (i32, i32) {
    %c0_i32 = arith.constant 0 : i32
    %c0_i32_0 = arith.constant 0 : i32
    return %arg0, %c0_i32 : i32, i32
  }
  func.func @transform_1(%arg0: i32) -> (i32, i32) {
    %c0_i32 = arith.constant 0 : i32
    %c0_i32_0 = arith.constant 0 : i32
    %c0_i32_1 = arith.constant 0 : i32
    return %c0_i32, %c0_i32_0 : i32, i32
  }
  func.func @transform_2(%arg0: i32) -> (i32, i32) {
    %c0_i32 = arith.constant 0 : i32
    %c0_i32_0 = arith.constant 0 : i32
    %c0_i32_1 = arith.constant 0 : i32
    return %c0_i32, %c0_i32_0 : i32, i32
  }
  func.func @transform_3(%arg0: i32) -> (i32, i32) {
    %c0_i32 = arith.constant 0 : i32
    %c0_i32_0 = arith.constant 0 : i32
    %c0_i32_1 = arith.constant 0 : i32
    return %c0_i32, %c0_i32_0 : i32, i32
  }
  func.func @transform_4(%arg0: i32) -> (i32, i32) {
    %c0_i32 = arith.constant 0 : i32
    %c0_i32_0 = arith.constant 0 : i32
    %c0_i32_1 = arith.constant 0 : i32
    return %c0_i32, %c0_i32_0 : i32, i32
  }
  func.func @transform_5(%arg0: i32) -> (i32, i32) {
    %c0_i32 = arith.constant 0 : i32
    %c0_i32_0 = arith.constant 0 : i32
    %c0_i32_1 = arith.constant 0 : i32
    return %c0_i32, %c0_i32_0 : i32, i32
  }
  func.func @transform_6(%arg0: i32) -> (i32, i32) {
    %c0_i32 = arith.constant 0 : i32
    %c0_i32_0 = arith.constant 0 : i32
    %c0_i32_1 = arith.constant 0 : i32
    return %c0_i32, %c0_i32_0 : i32, i32
  }
  func.func @transform_7(%arg0: i32) -> (i32, i32) {
    %c0_i32 = arith.constant 0 : i32
    %c0_i32_0 = arith.constant 0 : i32
    %c0_i32_1 = arith.constant 0 : i32
    return %c0_i32, %c0_i32_0 : i32, i32
  }
  func.func @transform_8(%arg0: i32) -> (i32, i32) {
    %c0_i32 = arith.constant 0 : i32
    %c0_i32_0 = arith.constant 0 : i32
    %c0_i32_1 = arith.constant 0 : i32
    return %c0_i32, %c0_i32_0 : i32, i32
  }
  func.func @transform_9(%arg0: i32) -> (i32, i32) {
    %c0_i32 = arith.constant 0 : i32
    %c0_i32_0 = arith.constant 0 : i32
    %c0_i32_1 = arith.constant 0 : i32
    return %c0_i32, %c0_i32_0 : i32, i32
  }
  func.func @transform_10(%arg0: i32) -> (i32, i32) {
    %c0_i32 = arith.constant 0 : i32
    %c0_i32_0 = arith.constant 0 : i32
    %c0_i32_1 = arith.constant 0 : i32
    return %c0_i32, %c0_i32_0 : i32, i32
  }
  func.func @transform_11(%arg0: i32) -> (i32, i32) {
    %c0_i32 = arith.constant 0 : i32
    %c0_i32_0 = arith.constant 0 : i32
    %c0_i32_1 = arith.constant 0 : i32
    return %c0_i32, %c0_i32_0 : i32, i32
  }
  func.func @transform_12(%arg0: i32) -> (i32, i32) {
    %c0_i32 = arith.constant 0 : i32
    %c0_i32_0 = arith.constant 0 : i32
    %c0_i32_1 = arith.constant 0 : i32
    return %c0_i32, %c0_i32_0 : i32, i32
  }
  func.func @transform_13(%arg0: i32) -> (i32, i32) {
    %c0_i32 = arith.constant 0 : i32
    %c0_i32_0 = arith.constant 0 : i32
    return %arg0, %c0_i32 : i32, i32
  }
  func.func @transform_14(%arg0: i32) -> (i32, i32) {
    %c0_i32 = arith.constant 0 : i32
    %c0_i32_0 = arith.constant 0 : i32
    return %arg0, %c0_i32 : i32, i32
  }
}

</mosaic_0001>

<llo_original>
// kernel: tpu_custom_call.1
$region0: #{tpu_custom_call.1}
  #allocation0 [shape = 'u32[]', space=smem, size = 0x4, offset = 0x4, fixed_abs, tag = 'smem constant byte address 0x4 - core index']
  #allocation1 [shape = 'u32[72,128]{1,0:T(1,128)}', space=vmem, size = 0x9000, scoped, tag = 'internal scratch']
  %s0 = inlined_call_operand.hbm [shape: f32[8,128], index: 0, kind: input, shape index: {}]
  %s1 = inlined_call_operand.hbm [shape: f32[128,128], index: 1, kind: input, shape index: {}]
  %s2 = inlined_call_operand.vmem [shape: f32[1,128], index: 2, kind: input, shape index: {}]
  %s3 = inlined_call_operand.hbm [shape: f32[128,128], index: 3, kind: input, shape index: {}]
  %s4 = inlined_call_operand.vmem [shape: f32[1,128], index: 4, kind: input, shape index: {}]
  %s5 = inlined_call_operand.hbm [shape: f32[128,128], index: 5, kind: input, shape index: {}]
  %s6 = inlined_call_operand.vmem [shape: f32[1,128], index: 6, kind: input, shape index: {}]
  %s7 = inlined_call_operand.hbm [shape: f32[128,128], index: 7, kind: input, shape index: {}]
  %s8 = inlined_call_operand.vmem [shape: f32[1,128], index: 8, kind: input, shape index: {}]
  %s9 = inlined_call_operand.hbm [shape: f32[128,128], index: 9, kind: input, shape index: {}]
  %s10 = inlined_call_operand.vmem [shape: f32[1,128], index: 10, kind: input, shape index: {}]
  %s11 = inlined_call_operand.hbm [shape: f32[128,128], index: 11, kind: input, shape index: {}]
  %s12 = inlined_call_operand.vmem [shape: f32[1,128], index: 12, kind: input, shape index: {}]
  %s13 = inlined_call_operand.hbm [shape: f32[8,128], index: 13, kind: output, shape index: {0}]
  %s14 = inlined_call_operand.hbm [shape: f32[8,128], index: 14, kind: output, shape index: {1}]
  %15 = xla_tuple %s13, %s14
  %s16 = sld [smem:[#allocation0]]
  $region98: #{tpu_custom_call.1} parent=0
    _
  %s18 = ssub.s32 1, %s16
  %s19 = scalar_select 0, %s18, %s16
  $region1: #{tpu_custom_call.1} parent=0
    #allocation2 [shape = 'u8[4096]{0}', space=vmem, size = 0x1000, scoped, tag = 'input window, operand 0, single buffered']
    #allocation3 [shape = 's32[1]{0}', space=sflag, size = 0x4, scoped, tag = 'scoped memory for tpu_custom_call.1']
    #allocation4 [shape = 's32[1]{0}', space=sflag, size = 0x4, scoped, tag = 'scoped memory for tpu_custom_call.1']
    #allocation5 [shape = 'u8[65536]{0}', space=vmem, size = 0x10000, scoped, tag = 'input window, operand 1, single buffered']
    #allocation6 [shape = 's32[1]{0}', space=sflag, size = 0x4, scoped, tag = 'scoped memory for tpu_custom_call.1']
    #allocation7 [shape = 'u8[65536]{0}', space=vmem, size = 0x10000, scoped, tag = 'input window, operand 3, single buffered']
    #allocation8 [shape = 'u8[65536]{0}', space=vmem, size = 0x10000, scoped, tag = 'input window, operand 5, single buffered']
    #allocation9 [shape = 's32[1]{0}', space=sflag, size = 0x4, scoped, tag = 'scoped memory for tpu_custom_call.1']
    #allocation10 [shape = 'u8[65536]{0}', space=vmem, size = 0x10000, scoped, tag = 'input window, operand 7, single buffered']
    #allocation11 [shape = 'u8[65536]{0}', space=vmem, size = 0x10000, scoped, tag = 'input window, operand 9, single buffered']
    #allocation12 [shape = 's32[1]{0}', space=sflag, size = 0x4, scoped, tag = 'scoped memory for tpu_custom_call.1']
    #allocation13 [shape = 'u8[65536]{0}', space=vmem, size = 0x10000, scoped, tag = 'input window, operand 11, single buffered']
    #allocation14 [shape = 'u8[4096]{0}', space=vmem, size = 0x1000, scoped, tag = 'output window, operand 0, single buffered']
    #allocation15 [shape = 'u8[4096]{0}', space=vmem, size = 0x1000, scoped, tag = 'output window, operand 1, single buffered']
    #allocation16 [shape = 's32[1]{0}', space=sflag, size = 0x4, scoped, tag = 'scoped memory for tpu_custom_call.1']
    %20 = vsyncpa [#allocation3], 0
    %21 = vsyncpa [#allocation6], 0
    %22 = vsyncpa [#allocation9], 0
    %23 = vsyncpa [#allocation12], 0
    %24 = vsyncpa [#allocation4], 0
    %25 = vsyncpa [#allocation16], 0
    // Predicated region
    $region2: #{tpu_custom_call.1} parent=1 // pred_check
      _
    $region3: #{tpu_custom_call.1} parent=1 // pred_check_branch
      %27 = sbr.rel (0) target = $region5
    $region4: #{tpu_custom_call.1} parent=1 // pred_region
      %29 = vsyncadd [#allocation3], 0
      %s31 = sshll.u32 %s0, 4
      %s32 = int_to_ptr.hbm [resolvable:$true] %s31
      %s33 = sshll.u32 [#allocation2], 4
      %s34 = int_to_ptr.vmem [resolvable:$true] %s33
      %36 = dma.hbm_to_vmem [thread:$0]  %s32, 128, %s34, [#allocation3]
    $region5: #{tpu_custom_call.1} parent=1 // pred_fallthru
      _
    // Predicated region
    $region6: #{tpu_custom_call.1} parent=1 // pred_check
      _
    $region7: #{tpu_custom_call.1} parent=1 // pred_check_branch
      %38 = sbr.rel (0) target = $region9
    $region8: #{tpu_custom_call.1} parent=1 // pred_region
      %40 = vsyncadd [#allocation6], 0
      %s41 = sshll.u32 %s1, 4
      %s42 = int_to_ptr.hbm [resolvable:$true] %s41
      %s43 = sshll.u32 [#allocation5], 4
      %s44 = int_to_ptr.vmem [resolvable:$true] %s43
      %49 = dma.hbm_to_vmem [thread:$0]  %s42, 2048, %s44, [#allocation6], 128, 128, 8
    $region9: #{tpu_custom_call.1} parent=1 // pred_fallthru
      _
    // Predicated region
    $region10: #{tpu_custom_call.1} parent=1 // pred_check
      _
    $region11: #{tpu_custom_call.1} parent=1 // pred_check_branch
      %51 = sbr.rel (0) target = $region13
    $region12: #{tpu_custom_call.1} parent=1 // pred_region
      _
    $region13: #{tpu_custom_call.1} parent=1 // pred_fallthru
      _
    // Predicated region
    $region14: #{tpu_custom_call.1} parent=1 // pred_check
      _
    $region15: #{tpu_custom_call.1} parent=1 // pred_check_branch
      %53 = sbr.rel (0) target = $region17
    $region16: #{tpu_custom_call.1} parent=1 // pred_region
      %55 = vsyncadd [#allocation6], 0
      %s56 = sshll.u32 %s3, 4
      %s57 = int_to_ptr.hbm [resolvable:$true] %s56
      %s58 = sshll.u32 [#allocation7], 4
      %s59 = int_to_ptr.vmem [resolvable:$true] %s58
      %64 = dma.hbm_to_vmem [thread:$0]  %s57, 2048, %s59, [#allocation6], 128, 128, 8
    $region17: #{tpu_custom_call.1} parent=1 // pred_fallthru
      _
    // Predicated region
    $region18: #{tpu_custom_call.1} parent=1 // pred_check
      _
    $region19: #{tpu_custom_call.1} parent=1 // pred_check_branch
      %66 = sbr.rel (0) target = $region21
    $region20: #{tpu_custom_call.1} parent=1 // pred_region
      _
    $region21: #{tpu_custom_call.1} parent=1 // pred_fallthru
      _
    // Predicated region
    $region22: #{tpu_custom_call.1} parent=1 // pred_check
      _
    $region23: #{tpu_custom_call.1} parent=1 // pred_check_branch
      %68 = sbr.rel (0) target = $region25
    $region24: #{tpu_custom_call.1} parent=1 // pred_region
      %70 = vsyncadd [#allocation9], 0
      %s71 = sshll.u32 %s5, 4
      %s72 = int_to_ptr.hbm [resolvable:$true] %s71
      %s73 = sshll.u32 [#allocation8], 4
      %s74 = int_to_ptr.vmem [resolvable:$true] %s73
      %79 = dma.hbm_to_vmem [thread:$0]  %s72, 2048, %s74, [#allocation9], 128, 128, 8
    $region25: #{tpu_custom_call.1} parent=1 // pred_fallthru
      _
    // Predicated region
    $region26: #{tpu_custom_call.1} parent=1 // pred_check
      _
    $region27: #{tpu_custom_call.1} parent=1 // pred_check_branch
      %81 = sbr.rel (0) target = $region29
    $region28: #{tpu_custom_call.1} parent=1 // pred_region
      _
    $region29: #{tpu_custom_call.1} parent=1 // pred_fallthru
      _
    // Predicated region
    $region30: #{tpu_custom_call.1} parent=1 // pred_check
      _
    $region31: #{tpu_custom_call.1} parent=1 // pred_check_branch
      %83 = sbr.rel (0) target = $region33
    $region32: #{tpu_custom_call.1} parent=1 // pred_region
      %85 = vsyncadd [#allocation9], 0
      %s86 = sshll.u32 %s7, 4
      %s87 = int_to_ptr.hbm [resolvable:$true] %s86
      %s88 = sshll.u32 [#allocation10], 4
      %s89 = int_to_ptr.vmem [resolvable:$true] %s88
      %94 = dma.hbm_to_vmem [thread:$0]  %s87, 2048, %s89, [#allocation9], 128, 128, 8
    $region33: #{tpu_custom_call.1} parent=1 // pred_fallthru
      _
    // Predicated region
    $region34: #{tpu_custom_call.1} parent=1 // pred_check
      _
    $region35: #{tpu_custom_call.1} parent=1 // pred_check_branch
      %96 = sbr.rel (0) target = $region37
    $region36: #{tpu_custom_call.1} parent=1 // pred_region
      _
    $region37: #{tpu_custom_call.1} parent=1 // pred_fallthru
      _
    // Predicated region
    $region38: #{tpu_custom_call.1} parent=1 // pred_check
      _
    $region39: #{tpu_custom_call.1} parent=1 // pred_check_branch
      %98 = sbr.rel (0) target = $region41
    $region40: #{tpu_custom_call.1} parent=1 // pred_region
      %100 = vsyncadd [#allocation12], 0
      %s101 = sshll.u32 %s9, 4
      %s102 = int_to_ptr.hbm [resolvable:$true] %s101
      %s103 = sshll.u32 [#allocation11], 4
      %s104 = int_to_ptr.vmem [resolvable:$true] %s103
      %109 = dma.hbm_to_vmem [thread:$0]  %s102, 2048, %s104, [#allocation12], 128, 128, 8
    $region41: #{tpu_custom_call.1} parent=1 // pred_fallthru
      _
    // Predicated region
    $region42: #{tpu_custom_call.1} parent=1 // pred_check
      _
    $region43: #{tpu_custom_call.1} parent=1 // pred_check_branch
      %111 = sbr.rel (0) target = $region45
    $region44: #{tpu_custom_call.1} parent=1 // pred_region
      _
    $region45: #{tpu_custom_call.1} parent=1 // pred_fallthru
      _
    // Predicated region
    $region46: #{tpu_custom_call.1} parent=1 // pred_check
      _
    $region47: #{tpu_custom_call.1} parent=1 // pred_check_branch
      %113 = sbr.rel (0) target = $region49
    $region48: #{tpu_custom_call.1} parent=1 // pred_region
      %115 = vsyncadd [#allocation12], 0
      %s116 = sshll.u32 %s11, 4
      %s117 = int_to_ptr.hbm [resolvable:$true] %s116
      %s118 = sshll.u32 [#allocation13], 4
      %s119 = int_to_ptr.vmem [resolvable:$true] %s118
      %124 = dma.hbm_to_vmem [thread:$0]  %s117, 2048, %s119, [#allocation12], 128, 128, 8
    $region49: #{tpu_custom_call.1} parent=1 // pred_fallthru
      _
    // Predicated region
    $region50: #{tpu_custom_call.1} parent=1 // pred_check
      _
    $region51: #{tpu_custom_call.1} parent=1 // pred_check_branch
      %126 = sbr.rel (0) target = $region53
    $region52: #{tpu_custom_call.1} parent=1 // pred_region
      _
    $region53: #{tpu_custom_call.1} parent=1 // pred_fallthru
      _
    // Predicated region
    $region54: #{tpu_custom_call.1} parent=1 // pred_check
      _
    $region55: #{tpu_custom_call.1} parent=1 // pred_check_branch
      %128 = sbr.rel (0) target = $region57
    $region56: #{tpu_custom_call.1} parent=1 // pred_region
      %130 = dma.done [#allocation3], 128
    $region57: #{tpu_custom_call.1} parent=1 // pred_fallthru
      _
    // Predicated region
    $region58: #{tpu_custom_call.1} parent=1 // pred_check
      _
    $region59: #{tpu_custom_call.1} parent=1 // pred_check_branch
      %132 = sbr.rel (0) target = $region61
    $region60: #{tpu_custom_call.1} parent=1 // pred_region
      %134 = dma.done [#allocation6], 2048
    $region61: #{tpu_custom_call.1} parent=1 // pred_fallthru
      _
    // Predicated region
    $region62: #{tpu_custom_call.1} parent=1 // pred_check
      _
    $region63: #{tpu_custom_call.1} parent=1 // pred_check_branch
      %136 = sbr.rel (0) target = $region65
    $region64: #{tpu_custom_call.1} parent=1 // pred_region
      %138 = dma.done [#allocation6], 2048
    $region65: #{tpu_custom_call.1} parent=1 // pred_fallthru
      _
    // Predicated region
    $region66: #{tpu_custom_call.1} parent=1 // pred_check
      _
    $region67: #{tpu_custom_call.1} parent=1 // pred_check_branch
      %140 = sbr.rel (0) target = $region69
    $region68: #{tpu_custom_call.1} parent=1 // pred_region
      %142 = dma.done [#allocation9], 2048
    $region69: #{tpu_custom_call.1} parent=1 // pred_fallthru
      _
    // Predicated region
    $region70: #{tpu_custom_call.1} parent=1 // pred_check
      _
    $region71: #{tpu_custom_call.1} parent=1 // pred_check_branch
      %144 = sbr.rel (0) target = $region73
    $region72: #{tpu_custom_call.1} parent=1 // pred_region
      %146 = dma.done [#allocation9], 2048
    $region73: #{tpu_custom_call.1} parent=1 // pred_fallthru
      _
    // Predicated region
    $region74: #{tpu_custom_call.1} parent=1 // pred_check
      _
    $region75: #{tpu_custom_call.1} parent=1 // pred_check_branch
      %148 = sbr.rel (0) target = $region77
    $region76: #{tpu_custom_call.1} parent=1 // pred_region
      %150 = dma.done [#allocation12], 2048
    $region77: #{tpu_custom_call.1} parent=1 // pred_fallthru
      _
    // Predicated region
    $region78: #{tpu_custom_call.1} parent=1 // pred_check
      _
    $region79: #{tpu_custom_call.1} parent=1 // pred_check_branch
      %152 = sbr.rel (0) target = $region81
    $region80: #{tpu_custom_call.1} parent=1 // pred_region
      %154 = dma.done [#allocation12], 2048
    $region81: #{tpu_custom_call.1} parent=1 // pred_fallthru
      _
    %v155 = vld [vmem:[#allocation2] sm:$0xff]
    %v156 = vld [vmem:[#allocation5] sm:$0xff]
    %v157 = vld [vmem:[#allocation5 + $0x8] sm:$0xff]
    %v158 = vld [vmem:[#allocation5 + $0x10] sm:$0xff]
    %v159 = vld [vmem:[#allocation5 + $0x18] sm:$0xff]
    %v160 = vld [vmem:[#allocation5 + $0x20] sm:$0xff]
    %v161 = vld [vmem:[#allocation5 + $0x28] sm:$0xff]
    %v162 = vld [vmem:[#allocation5 + $0x30] sm:$0xff]
    %v163 = vld [vmem:[#allocation5 + $0x38] sm:$0xff]
    %v164 = vld [vmem:[#allocation5 + $0x40] sm:$0xff]
    %v165 = vld [vmem:[#allocation5 + $0x48] sm:$0xff]
    %v166 = vld [vmem:[#allocation5 + $0x50] sm:$0xff]
    %v167 = vld [vmem:[#allocation5 + $0x58] sm:$0xff]
    %v168 = vld [vmem:[#allocation5 + $0x60] sm:$0xff]
    %v169 = vld [vmem:[#allocation5 + $0x68] sm:$0xff]
    %v170 = vld [vmem:[#allocation5 + $0x70] sm:$0xff]
    %v171 = vld [vmem:[#allocation5 + $0x78] sm:$0xff]
    %v172 = vld [vmem:[%s2] sm:$0x1]
    %v174 = vperm.slane %v172, 0
    %176 = vmatpush.msra.mxu0 %v171
    %177 = vmatpush.msra.mxu0 %v170
    %178 = vmatpush.msra.mxu0 %v169
    %179 = vmatpush.msra.mxu0 %v168
    %180 = vmatpush.msra.mxu0 %v167
    %181 = vmatpush.msra.mxu0 %v166
    %182 = vmatpush.msra.mxu0 %v165
    %183 = vmatpush.msra.mxu0 %v164
    %184 = vmatpush.msra.mxu0 %v163
    %185 = vmatpush.msra.mxu0 %v162
    %186 = vmatpush.msra.mxu0 %v161
    %187 = vmatpush.msra.mxu0 %v160
    %188 = vmatpush.msra.mxu0 %v159
    %189 = vmatpush.msra.mxu0 %v158
    %190 = vmatpush.msra.mxu0 %v157
    %191 = vmatpush.msra.mxu0 %v156
    %192 = vmatmul.f32.gmra.mxu0 %v155
    %v193 = vpop.f32.mrf.mxu0
    %v194 = vadd.f32 %v174, %v193
    %195 = vdwg.mxu0
    %v196 = vmax.f32 %v194, 0.0
    %v197 = vld [vmem:[#allocation7] sm:$0xff]
    %v198 = vld [vmem:[#allocation7 + $0x8] sm:$0xff]
    %v199 = vld [vmem:[#allocation7 + $0x10] sm:$0xff]
    %v200 = vld [vmem:[#allocation7 + $0x18] sm:$0xff]
    %v201 = vld [vmem:[#allocation7 + $0x20] sm:$0xff]
    %v202 = vld [vmem:[#allocation7 + $0x28] sm:$0xff]
    %v203 = vld [vmem:[#allocation7 + $0x30] sm:$0xff]
    %v204 = vld [vmem:[#allocation7 + $0x38] sm:$0xff]
    %v205 = vld [vmem:[#allocation7 + $0x40] sm:$0xff]
    %v206 = vld [vmem:[#allocation7 + $0x48] sm:$0xff]
    %v207 = vld [vmem:[#allocation7 + $0x50] sm:$0xff]
    %v208 = vld [vmem:[#allocation7 + $0x58] sm:$0xff]
    %v209 = vld [vmem:[#allocation7 + $0x60] sm:$0xff]
    %v210 = vld [vmem:[#allocation7 + $0x68] sm:$0xff]
    %v211 = vld [vmem:[#allocation7 + $0x70] sm:$0xff]
    %v212 = vld [vmem:[#allocation7 + $0x78] sm:$0xff]
    %v213 = vld [vmem:[%s4] sm:$0x1]
    %v215 = vperm.slane %v213, 0
    %217 = vmatpush.msra.mxu0 %v212
    %218 = vmatpush.msra.mxu0 %v211
    %219 = vmatpush.msra.mxu0 %v210
    %220 = vmatpush.msra.mxu0 %v209
    %221 = vmatpush.msra.mxu0 %v208
    %222 = vmatpush.msra.mxu0 %v207
    %223 = vmatpush.msra.mxu0 %v206
    %224 = vmatpush.msra.mxu0 %v205
    %225 = vmatpush.msra.mxu0 %v204
    %226 = vmatpush.msra.mxu0 %v203
    %227 = vmatpush.msra.mxu0 %v202
    %228 = vmatpush.msra.mxu0 %v201
    %229 = vmatpush.msra.mxu0 %v200
    %230 = vmatpush.msra.mxu0 %v199
    %231 = vmatpush.msra.mxu0 %v198
    %232 = vmatpush.msra.mxu0 %v197
    %233 = vmatmul.f32.gmra.mxu0 %v196
    %v234 = vpop.f32.mrf.mxu0
    %v235 = vadd.f32 %v215, %v234
    %236 = vdwg.mxu0
    %v237 = vmax.f32 %v235, 0.0
    %v238 = vld [vmem:[#allocation8] sm:$0xff]
    %v239 = vld [vmem:[#allocation8 + $0x8] sm:$0xff]
    %v240 = vld [vmem:[#allocation8 + $0x10] sm:$0xff]
    %v241 = vld [vmem:[#allocation8 + $0x18] sm:$0xff]
    %v242 = vld [vmem:[#allocation8 + $0x20] sm:$0xff]
    %v243 = vld [vmem:[#allocation8 + $0x28] sm:$0xff]
    %v244 = vld [vmem:[#allocation8 + $0x30] sm:$0xff]
    %v245 = vld [vmem:[#allocation8 + $0x38] sm:$0xff]
    %v246 = vld [vmem:[#allocation8 + $0x40] sm:$0xff]
    %v247 = vld [vmem:[#allocation8 + $0x48] sm:$0xff]
    %v248 = vld [vmem:[#allocation8 + $0x50] sm:$0xff]
    %v249 = vld [vmem:[#allocation8 + $0x58] sm:$0xff]
    %v250 = vld [vmem:[#allocation8 + $0x60] sm:$0xff]
    %v251 = vld [vmem:[#allocation8 + $0x68] sm:$0xff]
    %v252 = vld [vmem:[#allocation8 + $0x70] sm:$0xff]
    %v253 = vld [vmem:[#allocation8 + $0x78] sm:$0xff]
    %v254 = vld [vmem:[%s6] sm:$0x1]
    %v255 = vld [vmem:[#allocation10] sm:$0xff]
    %v256 = vld [vmem:[#allocation10 + $0x8] sm:$0xff]
    %v257 = vld [vmem:[#allocation10 + $0x10] sm:$0xff]
    %v258 = vld [vmem:[#allocation10 + $0x18] sm:$0xff]
    %v259 = vld [vmem:[#allocation10 + $0x20] sm:$0xff]
    %v260 = vld [vmem:[#allocation10 + $0x28] sm:$0xff]
    %v261 = vld [vmem:[#allocation10 + $0x30] sm:$0xff]
    %v262 = vld [vmem:[#allocation10 + $0x38] sm:$0xff]
    %v263 = vld [vmem:[#allocation10 + $0x40] sm:$0xff]
    %v264 = vld [vmem:[#allocation10 + $0x48] sm:$0xff]
    %v265 = vld [vmem:[#allocation10 + $0x50] sm:$0xff]
    %v266 = vld [vmem:[#allocation10 + $0x58] sm:$0xff]
    %v267 = vld [vmem:[#allocation10 + $0x60] sm:$0xff]
    %v268 = vld [vmem:[#allocation10 + $0x68] sm:$0xff]
    %v269 = vld [vmem:[#allocation10 + $0x70] sm:$0xff]
    %v270 = vld [vmem:[#allocation10 + $0x78] sm:$0xff]
    %v271 = vld [vmem:[%s8] sm:$0x1]
    %v273 = vperm.slane %v254, 0
    %275 = vmatpush.msra.mxu0 %v253
    %276 = vmatpush.msra.mxu0 %v252
    %277 = vmatpush.msra.mxu0 %v251
    %278 = vmatpush.msra.mxu0 %v250
    %279 = vmatpush.msra.mxu0 %v249
    %280 = vmatpush.msra.mxu0 %v248
    %281 = vmatpush.msra.mxu0 %v247
    %282 = vmatpush.msra.mxu0 %v246
    %283 = vmatpush.msra.mxu0 %v245
    %284 = vmatpush.msra.mxu0 %v244
    %285 = vmatpush.msra.mxu0 %v243
    %286 = vmatpush.msra.mxu0 %v242
    %287 = vmatpush.msra.mxu0 %v241
    %288 = vmatpush.msra.mxu0 %v240
    %289 = vmatpush.msra.mxu0 %v239
    %290 = vmatpush.msra.mxu0 %v238
    %291 = vmatmul.f32.gmra.mxu0 %v237
    %v292 = vpop.f32.mrf.mxu0
    %v293 = vadd.f32 %v273, %v292
    %294 = vdwg.mxu0
    %v295 = vmax.f32 %v293, 0.0
    %v297 = vperm.slane %v271, 0
    %299 = vmatpush.msra.mxu0 %v270
    %300 = vmatpush.msra.mxu0 %v269
    %301 = vmatpush.msra.mxu0 %v268
    %302 = vmatpush.msra.mxu0 %v267
    %303 = vmatpush.msra.mxu0 %v266
    %304 = vmatpush.msra.mxu0 %v265
    %305 = vmatpush.msra.mxu0 %v264
    %306 = vmatpush.msra.mxu0 %v263
    %307 = vmatpush.msra.mxu0 %v262
    %308 = vmatpush.msra.mxu0 %v261
    %309 = vmatpush.msra.mxu0 %v260
    %310 = vmatpush.msra.mxu0 %v259
    %311 = vmatpush.msra.mxu0 %v258
    %312 = vmatpush.msra.mxu0 %v257
    %313 = vmatpush.msra.mxu0 %v256
    %314 = vmatpush.msra.mxu0 %v255
    %315 = vmatmul.f32.gmra.mxu0 %v295
    %v316 = vpop.f32.mrf.mxu0
    %v317 = vadd.f32 %v297, %v316
    %318 = vdwg.mxu0
    %319 = vst [vmem:[#allocation14] sm:$0xff] %v317
    %v320 = vld [vmem:[#allocation11] sm:$0xff]
    %v321 = vld [vmem:[#allocation11 + $0x8] sm:$0xff]
    %v322 = vld [vmem:[#allocation11 + $0x10] sm:$0xff]
    %v323 = vld [vmem:[#allocation11 + $0x18] sm:$0xff]
    %v324 = vld [vmem:[#allocation11 + $0x20] sm:$0xff]
    %v325 = vld [vmem:[#allocation11 + $0x28] sm:$0xff]
    %v326 = vld [vmem:[#allocation11 + $0x30] sm:$0xff]
    %v327 = vld [vmem:[#allocation11 + $0x38] sm:$0xff]
    %v328 = vld [vmem:[#allocation11 + $0x40] sm:$0xff]
    %v329 = vld [vmem:[#allocation11 + $0x48] sm:$0xff]
    %v330 = vld [vmem:[#allocation11 + $0x50] sm:$0xff]
    %v331 = vld [vmem:[#allocation11 + $0x58] sm:$0xff]
    %v332 = vld [vmem:[#allocation11 + $0x60] sm:$0xff]
    %v333 = vld [vmem:[#allocation11 + $0x68] sm:$0xff]
    %v334 = vld [vmem:[#allocation11 + $0x70] sm:$0xff]
    %v335 = vld [vmem:[#allocation11 + $0x78] sm:$0xff]
    %v336 = vld [vmem:[%s10] sm:$0x1]
    %v337 = vld [vmem:[#allocation13] sm:$0xff]
    %v338 = vld [vmem:[#allocation13 + $0x8] sm:$0xff]
    %v339 = vld [vmem:[#allocation13 + $0x10] sm:$0xff]
    %v340 = vld [vmem:[#allocation13 + $0x18] sm:$0xff]
    %v341 = vld [vmem:[#allocation13 + $0x20] sm:$0xff]
    %v342 = vld [vmem:[#allocation13 + $0x28] sm:$0xff]
    %v343 = vld [vmem:[#allocation13 + $0x30] sm:$0xff]
    %v344 = vld [vmem:[#allocation13 + $0x38] sm:$0xff]
    %v345 = vld [vmem:[#allocation13 + $0x40] sm:$0xff]
    %v346 = vld [vmem:[#allocation13 + $0x48] sm:$0xff]
    %v347 = vld [vmem:[#allocation13 + $0x50] sm:$0xff]
    %v348 = vld [vmem:[#allocation13 + $0x58] sm:$0xff]
    %v349 = vld [vmem:[#allocation13 + $0x60] sm:$0xff]
    %v350 = vld [vmem:[#allocation13 + $0x68] sm:$0xff]
    %v351 = vld [vmem:[#allocation13 + $0x70] sm:$0xff]
    %v352 = vld [vmem:[#allocation13 + $0x78] sm:$0xff]
    %v353 = vld [vmem:[%s12] sm:$0x1]
    %v355 = vperm.slane %v336, 0
    %357 = vmatpush.msra.mxu0 %v335
    %358 = vmatpush.msra.mxu0 %v334
    %359 = vmatpush.msra.mxu0 %v333
    %360 = vmatpush.msra.mxu0 %v332
    %361 = vmatpush.msra.mxu0 %v331
    %362 = vmatpush.msra.mxu0 %v330
    %363 = vmatpush.msra.mxu0 %v329
    %364 = vmatpush.msra.mxu0 %v328
    %365 = vmatpush.msra.mxu0 %v327
    %366 = vmatpush.msra.mxu0 %v326
    %367 = vmatpush.msra.mxu0 %v325
    %368 = vmatpush.msra.mxu0 %v324
    %369 = vmatpush.msra.mxu0 %v323
    %370 = vmatpush.msra.mxu0 %v322
    %371 = vmatpush.msra.mxu0 %v321
    %372 = vmatpush.msra.mxu0 %v320
    %373 = vmatmul.f32.gmra.mxu0 %v237
    %v374 = vpop.f32.mrf.mxu0
    %v375 = vadd.f32 %v355, %v374
    %376 = vdwg.mxu0
    %v377 = vmax.f32 %v375, 0.0
    %v379 = vperm.slane %v353, 0
    %381 = vmatpush.msra.mxu0 %v352
    %382 = vmatpush.msra.mxu0 %v351
    %383 = vmatpush.msra.mxu0 %v350
    %384 = vmatpush.msra.mxu0 %v349
    %385 = vmatpush.msra.mxu0 %v348
    %386 = vmatpush.msra.mxu0 %v347
    %387 = vmatpush.msra.mxu0 %v346
    %388 = vmatpush.msra.mxu0 %v345
    %389 = vmatpush.msra.mxu0 %v344
    %390 = vmatpush.msra.mxu0 %v343
    %391 = vmatpush.msra.mxu0 %v342
    %392 = vmatpush.msra.mxu0 %v341
    %393 = vmatpush.msra.mxu0 %v340
    %394 = vmatpush.msra.mxu0 %v339
    %395 = vmatpush.msra.mxu0 %v338
    %396 = vmatpush.msra.mxu0 %v337
    %397 = vmatmul.f32.gmra.mxu0 %v377
    %v398 = vpop.f32.mrf.mxu0
    %v399 = vadd.f32 %v379, %v398
    %400 = vdwg.mxu0
    %401 = vst [vmem:[#allocation15] sm:$0xff] %v399
    // Predicated region
    $region82: #{tpu_custom_call.1} parent=1 // pred_check
      _
    $region83: #{tpu_custom_call.1} parent=1 // pred_check_branch
      %403 = sbr.rel (0) target = $region85
    $region84: #{tpu_custom_call.1} parent=1 // pred_region
      %405 = vsyncadd [#allocation4], 0
      %s407 = sshll.u32 [#allocation14], 4
      %s408 = int_to_ptr.vmem [resolvable:$true] %s407
      %s409 = sshll.u32 %s13, 4
      %s410 = int_to_ptr.hbm [resolvable:$true] %s409
      %412 = dma.vmem_to_hbm [thread:$0]  %s408, 128, %s410, [#allocation4]
    $region85: #{tpu_custom_call.1} parent=1 // pred_fallthru
      _
    // Predicated region
    $region86: #{tpu_custom_call.1} parent=1 // pred_check
      _
    $region87: #{tpu_custom_call.1} parent=1 // pred_check_branch
      %414 = sbr.rel (0) target = $region89
    $region88: #{tpu_custom_call.1} parent=1 // pred_region
      %416 = vsyncadd [#allocation16], 0
      %s418 = sshll.u32 [#allocation15], 4
      %s419 = int_to_ptr.vmem [resolvable:$true] %s418
      %s420 = sshll.u32 %s14, 4
      %s421 = int_to_ptr.hbm [resolvable:$true] %s420
      %423 = dma.vmem_to_hbm [thread:$0]  %s419, 128, %s421, [#allocation16]
    $region89: #{tpu_custom_call.1} parent=1 // pred_fallthru
      _
    // Predicated region
    $region90: #{tpu_custom_call.1} parent=1 // pred_check
      _
    $region91: #{tpu_custom_call.1} parent=1 // pred_check_branch
      %425 = sbr.rel (0) target = $region93
    $region92: #{tpu_custom_call.1} parent=1 // pred_region
      %427 = dma.done [#allocation4], 128
    $region93: #{tpu_custom_call.1} parent=1 // pred_fallthru
      _
    // Predicated region
    $region94: #{tpu_custom_call.1} parent=1 // pred_check
      _
    $region95: #{tpu_custom_call.1} parent=1 // pred_check_branch
      %429 = sbr.rel (0) target = $region97
    $region96: #{tpu_custom_call.1} parent=1 // pred_region
      %431 = dma.done [#allocation16], 128
    $region97: #{tpu_custom_call.1} parent=1 // pred_fallthru
      _
    %432 = vsyncpa [#allocation3], 1
    %433 = vsyncpa [#allocation6], 1
    %434 = vsyncpa [#allocation9], 1
    %435 = vsyncpa [#allocation12], 1
    %436 = vsyncpa [#allocation4], 1
    %437 = vsyncpa [#allocation16], 1

</llo_original>
